<compile_context>
chip_gen: v7x
topology: tpu7x:2x2x1
jax: 0.10.0
libtpu: 0.0.40
codegen_flags: <defaults>
</compile_context>

<pallas_src>
import jax
import jax.numpy as jnp
import numpy as np
from jax.experimental import pallas as pl
from jax.experimental.pallas import tpu as pltpu


def _round_up(x, m):
    return (x + m - 1) // m * m


def kan_kernel(xt_ref, w1i_ref, b1i_ref, wf_ref, bf_ref, w2_ref, b2_ref, o_ref):
    # Compute dtype for the MXU = whatever the wrapper cast the weights to
    # (bf16 by default, f32 in strict mode).  Accumulation is always f32.
    cd = w1i_ref.dtype
    xt = xt_ref[...]                                          # (D, TB), already cd

    # ---- InterpolationLayer fc1: h1 = sin(W1i @ x^T + b1i) : (IH, TB) -------
    h1 = jnp.sin(
        jnp.dot(w1i_ref[...], xt, preferred_element_type=jnp.float32)
        + b1i_ref[...])                                       # f32 elementwise

    # ---- Fused interp.fc2 + fc1: h2 = relu(W_fused @ h1 + b_fused) : (H, TB)
    h2 = jnp.maximum(
        jnp.dot(wf_ref[...], h1.astype(cd), preferred_element_type=jnp.float32)
        + bf_ref[...], 0.0)

    # ---- Final H -> 1 layer off the MXU: VPU multiply + sublane reduce ------
    o_ref[...] = (jnp.sum(h2 * w2_ref[...], axis=0, keepdims=True)
                  + b2_ref[...])                              # (1, TB) lane-dense


def kan_forward(x, params, *, tile_b=4096, use_bf16=True):
    """x: (B, D) float32.  params in PyTorch nn.Linear layout (see init_params);
    `w2` is fc2.weight transposed to (H, 1) so the kernel broadcasts it over lanes.
    """
    B, D = x.shape
    IH = params["w1i"].shape[0]     # interpolation hidden (16)
    H = params["w1"].shape[0]       # model hidden (64)
    O = params["w2"].shape[1]       # output dim (1)
    assert O == 1, "kernel's final VPU reduce assumes output_dim == 1"

    cd = jnp.bfloat16 if use_bf16 else jnp.float32

    # ---- fold interp.fc2 into fc1 (exact up to fp32 rounding) ---------------
    wf = params["w1"] @ params["w2i"]                     # (H, IH)
    bf = params["w1"] @ params["b2i"] + params["b1"]      # (H, 1)

    w1i = params["w1i"].astype(cd)                        # (IH, D)
    wf = wf.astype(cd)                                    # (H, IH)
    b1i = params["b1i"]                                   # (IH, 1) f32
    w2 = params["w2"]                                     # (H, O)  f32 (VPU path)
    b2 = params["b2"]                                     # (O, 1)  f32

    # ---- batch tiling: batch lives on the LANE axis --------------------------
    Bp0 = _round_up(B, 128)                               # lane-dense stores
    tb = min(_round_up(tile_b, 128), Bp0)
    if Bp0 >= 256 and tb >= Bp0:
        # split into >= 2 tiles so the ("parallel",) grid can use both v7x TCs
        tb = _round_up((Bp0 + 1) // 2, 128)
    Bp = _round_up(Bp0, tb)
    num_tiles = Bp // tb

    xt = x.astype(cd).T                                   # (D, B), cast once in XLA
    if Bp != B:
        xt = jnp.pad(xt, ((0, 0), (0, Bp - B)))           # zero-pad lanes

    full = lambda shape: pl.BlockSpec(shape, lambda i: (0, 0))

    itemsize = jnp.dtype(cd).itemsize
    cost = pl.CostEstimate(
        flops=2 * Bp * (D * IH + IH * H + H * O),
        transcendentals=Bp * IH,
        bytes_accessed=(itemsize * Bp * D + 4 * Bp * O
                        + itemsize * (IH * D + H * IH)
                        + 4 * (IH + H + H * O + O)),
    )

    out_row = pl.pallas_call(
        kan_kernel,
        out_shape=jax.ShapeDtypeStruct((1, Bp), jnp.float32),
        grid_spec=pltpu.PrefetchScalarGridSpec(
            num_scalar_prefetch=0,
            grid=(num_tiles,),
            in_specs=[
                pl.BlockSpec((D, tb), lambda i: (0, i)),   # x^T batch-column tile
                full((IH, D)), full((IH, 1)),              # interp fc1
                full((H, IH)), full((H, 1)),               # fused interp.fc2∘fc1
                full((H, O)),  full((O, 1)),               # head fc2
            ],
            out_specs=pl.BlockSpec((1, tb), lambda i: (0, i)),
        ),
        compiler_params=pltpu.CompilerParams(
            dimension_semantics=("parallel",)),
        cost_estimate=cost,
    )(xt, w1i, b1i, wf, bf, w2, b2)

    return out_row[0, :B].reshape(B, O)


def init_params(key, input_dim, interp_hidden=16, hidden_dim=64, output_dim=1):
    """Deterministic init mimicking nn.Linear's U(-1/sqrt(fan_in), 1/sqrt(fan_in)).
    Weights stored PyTorch-style (out_features, in_features); biases as columns."""
    def linear(k, fan_in, fan_out):
        kw, kb = jax.random.split(k)
        bound = 1.0 / np.sqrt(fan_in)
        w = jax.random.uniform(kw, (fan_out, fan_in), jnp.float32, -bound, bound)
        b = jax.random.uniform(kb, (fan_out, 1), jnp.float32, -bound, bound)
        return w, b

    k1, k2, k3, k4 = jax.random.split(key, 4)
    w1i, b1i = linear(k1, input_dim, interp_hidden)      # (IH, D), (IH, 1)
    w2i, b2i = linear(k2, interp_hidden, input_dim)      # (D, IH), (D, 1)
    w1, b1 = linear(k3, input_dim, hidden_dim)           # (H, D),  (H, 1)
    w2_pt, b2 = linear(k4, hidden_dim, output_dim)       # (O, H),  (O, 1)
    return dict(w1i=w1i, b1i=b1i, w2i=w2i, b2i=b2i,
                w1=w1, b1=b1, w2=jnp.transpose(w2_pt), b2=b2)   # w2: (H, O)


def kan_reference(x, p):
    """Pure-JAX fp32 reference mirroring the PyTorch forward exactly."""
    h1 = jnp.sin(x @ p["w1i"].T + p["b1i"].T)
    xi = h1 @ p["w2i"].T + p["b2i"].T
    h2 = jax.nn.relu(xi @ p["w1"].T + p["b1"].T)
    return h2 @ p["w2"] + p["b2"].T


if __name__ == "__main__":
    key = jax.random.PRNGKey(0)
    kx1, kx2, kp = jax.random.split(key, 3)

    input_dim = 32
    params = init_params(kp, input_dim, interp_hidden=16,
                         hidden_dim=64, output_dim=1)

    # 1) Default (bf16 matmul inputs), small ragged batch -> one 128-lane tile.
    #    bf16 + the fc2∘fc1 fold change fp32 rounding, so the check is loose.
    x_small = jax.random.normal(kx1, (12, input_dim), jnp.float32)
    out_small = jax.block_until_ready(kan_forward(x_small, params))
    ref_small = kan_reference(x_small, params)
    assert out_small.shape == (12, 1)
    np.testing.assert_allclose(np.asarray(out_small), np.asarray(ref_small),
                               rtol=5e-2, atol=5e-2)

    # 2) Strict fp32 matmuls, batch large enough to exercise the multi-tile
    #    (2-TensorCore) split path; tight check against the fp32 reference.
    x_big = jax.random.normal(kx2, (300, input_dim), jnp.float32)
    out_big = jax.block_until_ready(kan_forward(x_big, params, use_bf16=False))
    ref_big = kan_reference(x_big, params)
    assert out_big.shape == (300, 1)
    np.testing.assert_allclose(np.asarray(out_big), np.asarray(ref_big),
                               rtol=1e-4, atol=1e-4)

    print("KERNEL_OK")
</pallas_src>

<mosaic_0001>
module attributes {stable_mosaic.version = 11 : i64} {
  func.func @kan_kernel(%arg0: i32, %arg1: memref<32x128xbf16, #tpu.memory_space<vmem>>, %arg2: memref<16x32xbf16, #tpu.memory_space<vmem>>, %arg3: memref<16x1xf32, #tpu.memory_space<vmem>>, %arg4: memref<64x16xbf16, #tpu.memory_space<vmem>>, %arg5: memref<64x1xf32, #tpu.memory_space<vmem>>, %arg6: memref<64x1xf32, #tpu.memory_space<vmem>>, %arg7: memref<1x1xf32, #tpu.memory_space<vmem>>, %arg8: memref<1x128xf32, #tpu.memory_space<vmem>>) attributes {dimension_semantics = [#tpu.dimension_semantics<parallel>], iteration_bounds = array<i64: 1>, scalar_prefetch = 0 : i64, scratch_operands = 0 : i64, tpu.core_type = #tpu.core_type<tc>, window_params = [{transform_indices = @transform_0, window_bounds = array<i64: 32, 128>}, {pipeline_mode = #tpu.pipeline_mode<synchronous>, transform_indices = @transform_1, window_bounds = array<i64: 16, 32>}, {pipeline_mode = #tpu.pipeline_mode<synchronous>, transform_indices = @transform_2, window_bounds = array<i64: 16, 1>}, {pipeline_mode = #tpu.pipeline_mode<synchronous>, transform_indices = @transform_3, window_bounds = array<i64: 64, 16>}, {pipeline_mode = #tpu.pipeline_mode<synchronous>, transform_indices = @transform_4, window_bounds = array<i64: 64, 1>}, {pipeline_mode = #tpu.pipeline_mode<synchronous>, transform_indices = @transform_5, window_bounds = array<i64: 64, 1>}, {pipeline_mode = #tpu.pipeline_mode<synchronous>, transform_indices = @transform_6, window_bounds = array<i64: 1, 1>}, {transform_indices = @transform_7, window_bounds = array<i64: 1, 128>}]} {
    %c0 = arith.constant 0 : index
    %c0_0 = arith.constant 0 : index
    %0 = vector.load %arg1[%c0, %c0_0] : memref<32x128xbf16, #tpu.memory_space<vmem>>, vector<32x128xbf16>
    %c0_1 = arith.constant 0 : index
    %c0_2 = arith.constant 0 : index
    %1 = vector.load %arg2[%c0_1, %c0_2] : memref<16x32xbf16, #tpu.memory_space<vmem>>, vector<16x32xbf16>
    %cst = arith.constant dense<0.000000e+00> : vector<16x128xf32>
    %2 = tpu.matmul %1, %0, %cst {dimension_numbers = #tpu.dot_dimension_numbers<[1], [0], [0], [1], [0, 0, 1, 1], [], []>} : vector<16x32xbf16>, vector<32x128xbf16>, vector<16x128xf32> -> vector<16x128xf32>
    %c0_3 = arith.constant 0 : index
    %c0_4 = arith.constant 0 : index
    %3 = vector.load %arg3[%c0_3, %c0_4] : memref<16x1xf32, #tpu.memory_space<vmem>>, vector<16x1xf32>
    %4 = vector.broadcast %3 : vector<16x1xf32> to vector<16x128xf32>
    %5 = arith.addf %2, %4 : vector<16x128xf32>
    %6 = math.sin %5 : vector<16x128xf32>
    %c0_5 = arith.constant 0 : index
    %c0_6 = arith.constant 0 : index
    %7 = vector.load %arg4[%c0_5, %c0_6] : memref<64x16xbf16, #tpu.memory_space<vmem>>, vector<64x16xbf16>
    %8 = arith.truncf %6 : vector<16x128xf32> to vector<16x128xbf16>
    %cst_7 = arith.constant dense<0.000000e+00> : vector<64x128xf32>
    %9 = tpu.matmul %7, %8, %cst_7 {dimension_numbers = #tpu.dot_dimension_numbers<[1], [0], [0], [1], [0, 0, 1, 1], [], []>} : vector<64x16xbf16>, vector<16x128xbf16>, vector<64x128xf32> -> vector<64x128xf32>
    %c0_8 = arith.constant 0 : index
    %c0_9 = arith.constant 0 : index
    %10 = vector.load %arg5[%c0_8, %c0_9] : memref<64x1xf32, #tpu.memory_space<vmem>>, vector<64x1xf32>
    %11 = vector.broadcast %10 : vector<64x1xf32> to vector<64x128xf32>
    %12 = arith.addf %9, %11 : vector<64x128xf32>
    %cst_10 = arith.constant 0.000000e+00 : f32
    %13 = vector.broadcast %cst_10 : f32 to vector<64x128xf32>
    %14 = arith.maximumf %12, %13 : vector<64x128xf32>
    %c0_11 = arith.constant 0 : index
    %c0_12 = arith.constant 0 : index
    %15 = vector.load %arg6[%c0_11, %c0_12] : memref<64x1xf32, #tpu.memory_space<vmem>>, vector<64x1xf32>
    %16 = vector.broadcast %15 : vector<64x1xf32> to vector<64x128xf32>
    %17 = arith.mulf %14, %16 : vector<64x128xf32>
    %cst_13 = arith.constant dense<0.000000e+00> : vector<128xf32>
    %18 = vector.multi_reduction <add>, %17, %cst_13 [0] : vector<64x128xf32> to vector<128xf32>
    %19 = vector.shape_cast %18 : vector<128xf32> to vector<1x128xf32>
    %c0_14 = arith.constant 0 : index
    %c0_15 = arith.constant 0 : index
    %20 = vector.load %arg7[%c0_14, %c0_15] : memref<1x1xf32, #tpu.memory_space<vmem>>, vector<1x1xf32>
    %21 = vector.broadcast %20 : vector<1x1xf32> to vector<1x128xf32>
    %22 = arith.addf %19, %21 : vector<1x128xf32>
    %c0_16 = arith.constant 0 : index
    %c0_17 = arith.constant 0 : index
    %23 = vector.load %arg8[%c0_16, %c0_17] : memref<1x128xf32, #tpu.memory_space<vmem>>, vector<1x128xf32>
    tpu.vector_store %arg8[%c0_16, %c0_17], %22 {strides = array<i32>} : memref<1x128xf32, #tpu.memory_space<vmem>>, vector<1x128xf32>,
    return
  }
  func.func @transform_0(%arg0: i32) -> (i32, i32) {
    %c0_i32 = arith.constant 0 : i32
    %c0_i32_0 = arith.constant 0 : i32
    return %c0_i32, %arg0 : i32, i32
  }
  func.func @transform_1(%arg0: i32) -> (i32, i32) {
    %c0_i32 = arith.constant 0 : i32
    %c0_i32_0 = arith.constant 0 : i32
    %c0_i32_1 = arith.constant 0 : i32
    return %c0_i32, %c0_i32_0 : i32, i32
  }
  func.func @transform_2(%arg0: i32) -> (i32, i32) {
    %c0_i32 = arith.constant 0 : i32
    %c0_i32_0 = arith.constant 0 : i32
    %c0_i32_1 = arith.constant 0 : i32
    return %c0_i32, %c0_i32_0 : i32, i32
  }
  func.func @transform_3(%arg0: i32) -> (i32, i32) {
    %c0_i32 = arith.constant 0 : i32
    %c0_i32_0 = arith.constant 0 : i32
    %c0_i32_1 = arith.constant 0 : i32
    return %c0_i32, %c0_i32_0 : i32, i32
  }
  func.func @transform_4(%arg0: i32) -> (i32, i32) {
    %c0_i32 = arith.constant 0 : i32
    %c0_i32_0 = arith.constant 0 : i32
    %c0_i32_1 = arith.constant 0 : i32
    return %c0_i32, %c0_i32_0 : i32, i32
  }
  func.func @transform_5(%arg0: i32) -> (i32, i32) {
    %c0_i32 = arith.constant 0 : i32
    %c0_i32_0 = arith.constant 0 : i32
    %c0_i32_1 = arith.constant 0 : i32
    return %c0_i32, %c0_i32_0 : i32, i32
  }
  func.func @transform_6(%arg0: i32) -> (i32, i32) {
    %c0_i32 = arith.constant 0 : i32
    %c0_i32_0 = arith.constant 0 : i32
    %c0_i32_1 = arith.constant 0 : i32
    return %c0_i32, %c0_i32_0 : i32, i32
  }
  func.func @transform_7(%arg0: i32) -> (i32, i32) {
    %c0_i32 = arith.constant 0 : i32
    %c0_i32_0 = arith.constant 0 : i32
    return %c0_i32, %arg0 : i32, i32
  }
}

</mosaic_0001>

<llo_original>
// kernel: tpu_custom_call.1
$region0: #{tpu_custom_call.1}
  #allocation0 [shape = 'u32[]', space=smem, size = 0x4, offset = 0x4, fixed_abs, tag = 'smem constant byte address 0x4 - core index']
  #allocation1 [shape = 'u32[144,128]{1,0:T(1,128)}', space=vmem, size = 0x12000, scoped, tag = 'internal scratch']
  #allocation2 [shape = 'f32[1,1]{1,0:T(1,128)S(1)}', space=vmem, size = 0x200, scoped, tag = 'scoped memory for tpu_custom_call.1']
  %s0 = inlined_call_operand.vmem [shape: bf16[32,128], index: 0, kind: input, shape index: {}]
  %s1 = inlined_call_operand.vmem [shape: bf16[16,32], index: 1, kind: input, shape index: {}]
  %s2 = inlined_call_operand.vmem [shape: f32[16,1], index: 2, kind: input, shape index: {}]
  %s3 = inlined_call_operand.vmem [shape: bf16[64,16], index: 3, kind: input, shape index: {}]
  %s4 = inlined_call_operand.vmem [shape: f32[64,1], index: 4, kind: input, shape index: {}]
  %s5 = inlined_call_operand.vmem [shape: f32[64,1], index: 5, kind: input, shape index: {}]
  %s6 = inlined_call_operand.<no memory space> [shape: f32[1,1], index: 6, kind: input, shape index: {}]
  %s7 = inlined_call_operand.hbm [shape: f32[1,128], index: 7, kind: output, shape index: {}]
  %s8 = sld [smem:[#allocation0]]
  $region38: #{tpu_custom_call.1} parent=0
    _
  %s10 = ssub.s32 1, %s8
  %s11 = scalar_select 0, %s10, %s8
  %v12 = vstv %s6
  %13 = vst [vmem:[#allocation2] sm:$0x1] %v12
  $region1: #{tpu_custom_call.1} parent=0
    #allocation3 [shape = 'u8[512]{0}', space=vmem, size = 0x400, scoped, tag = 'output window, operand 0, single buffered']
    #allocation4 [shape = 's32[1]{0}', space=sflag, size = 0x4, scoped, tag = 'scoped memory for tpu_custom_call.1']
    %14 = vsyncpa [#allocation4], 0
    // Predicated region
    $region2: #{tpu_custom_call.1} parent=1 // pred_check
      _
    $region3: #{tpu_custom_call.1} parent=1 // pred_check_branch
      %16 = sbr.rel (0) target = $region5
    $region4: #{tpu_custom_call.1} parent=1 // pred_region
      _
    $region5: #{tpu_custom_call.1} parent=1 // pred_fallthru
      _
    // Predicated region
    $region6: #{tpu_custom_call.1} parent=1 // pred_check
      _
    $region7: #{tpu_custom_call.1} parent=1 // pred_check_branch
      %18 = sbr.rel (0) target = $region9
    $region8: #{tpu_custom_call.1} parent=1 // pred_region
      _
    $region9: #{tpu_custom_call.1} parent=1 // pred_fallthru
      _
    // Predicated region
    $region10: #{tpu_custom_call.1} parent=1 // pred_check
      _
    $region11: #{tpu_custom_call.1} parent=1 // pred_check_branch
      %20 = sbr.rel (0) target = $region13
    $region12: #{tpu_custom_call.1} parent=1 // pred_region
      _
    $region13: #{tpu_custom_call.1} parent=1 // pred_fallthru
      _
    // Predicated region
    $region14: #{tpu_custom_call.1} parent=1 // pred_check
      _
    $region15: #{tpu_custom_call.1} parent=1 // pred_check_branch
      %22 = sbr.rel (0) target = $region17
    $region16: #{tpu_custom_call.1} parent=1 // pred_region
      _
    $region17: #{tpu_custom_call.1} parent=1 // pred_fallthru
      _
    // Predicated region
    $region18: #{tpu_custom_call.1} parent=1 // pred_check
      _
    $region19: #{tpu_custom_call.1} parent=1 // pred_check_branch
      %24 = sbr.rel (0) target = $region21
    $region20: #{tpu_custom_call.1} parent=1 // pred_region
      _
    $region21: #{tpu_custom_call.1} parent=1 // pred_fallthru
      _
    // Predicated region
    $region22: #{tpu_custom_call.1} parent=1 // pred_check
      _
    $region23: #{tpu_custom_call.1} parent=1 // pred_check_branch
      %26 = sbr.rel (0) target = $region25
    $region24: #{tpu_custom_call.1} parent=1 // pred_region
      _
    $region25: #{tpu_custom_call.1} parent=1 // pred_fallthru
      _
    // Predicated region
    $region26: #{tpu_custom_call.1} parent=1 // pred_check
      _
    $region27: #{tpu_custom_call.1} parent=1 // pred_check_branch
      %28 = sbr.rel (0) target = $region29
    $region28: #{tpu_custom_call.1} parent=1 // pred_region
      _
    $region29: #{tpu_custom_call.1} parent=1 // pred_fallthru
      _
    %v30 = vld [vmem:[%s0] sm:$0xf]
    %v31 = vld [vmem:[%s0 + $0x4] sm:$0xf]
    %v32 = vld [vmem:[%s0 + $0x8] sm:$0xf]
    %v33 = vld [vmem:[%s0 + $0xc] sm:$0xf]
    %v34 = vld [vmem:[%s1] sm:$0xf]
    %v35 = vld [vmem:[%s1 + $0x4] sm:$0xf]
    %v36 = vld [vmem:[%s2] sm:$0xff]
    %v37 = vld [vmem:[%s2 + $0x8] sm:$0xff]
    %39 = vset.pattern.permute.xlu0 0
    %40 = vperm.xlu0 %39, %v36
    %v41 = vpop.permute.xlu0 %40
    %44 = vset.pattern.permute.xlu0 0
    %45 = vperm.xlu0 %44, %v37
    %v46 = vpop.permute.xlu0 %45
    %v50 = vunpack.c.l.b16 %v34
    %v51 = vunpack.c.l.b16 %v35
    %v52 = vpack.c.b16 %v51, %v50
    %v57 = vunpack.c.l.b16 %v30
    %v58 = vunpack.c.l.b16 %v31
    %v59 = vunpack.c.l.b16 %v32
    %v60 = vunpack.c.l.b16 %v33
    %v61 = vpack.c.b16 %v58, %v57
    %v62 = vpack.c.b16 %v60, %v59
    %vm65 = vcmask 261120
    %v67 = vsel %vm65, %v52, 0
    %69 = vmatprep.subr.bf16.mxu0 0
    %70 = vmatpush1.bf16.msra.mxu0 %v61
    %71 = vmatprep.subr.bf16.mxu0 0
    %72 = vmatpush1.bf16.msra.mxu0 %v62
    %73 = vmatprep.subr.bf16.mxu0 0
    %74 = vmatpush1.bf16.msra.mxu0 0
    %75 = vmatprep.subr.bf16.mxu0 0
    %76 = vmatpush1.bf16.msra.mxu0 0
    %77 = vmatprep.subr.bf16.mxu0 0
    %78 = vmatpush1.bf16.msra.mxu0 0
    %79 = vmatprep.subr.bf16.mxu0 0
    %80 = vmatpush1.bf16.msra.mxu0 0
    %81 = vmatprep.subr.bf16.mxu0 0
    %82 = vmatpush1.bf16.msra.mxu0 0
    %83 = vmatprep.subr.bf16.mxu0 0
    %84 = vmatpush1.bf16.msra.mxu0 0
    %85 = vmatprep.subr.bf16.mxu0 0
    %86 = vmatpush1.bf16.msra.mxu0 0
    %87 = vmatprep.subr.bf16.mxu0 0
    %88 = vmatpush1.bf16.msra.mxu0 0
    %89 = vmatprep.subr.bf16.mxu0 0
    %90 = vmatpush1.bf16.msra.mxu0 0
    %91 = vmatprep.subr.bf16.mxu0 0
    %92 = vmatpush1.bf16.msra.mxu0 0
    %93 = vmatprep.subr.bf16.mxu0 0
    %94 = vmatpush1.bf16.msra.mxu0 0
    %95 = vmatprep.subr.bf16.mxu0 0
    %96 = vmatpush1.bf16.msra.mxu0 0
    %97 = vmatprep.subr.bf16.mxu0 0
    %98 = vmatpush1.bf16.msra.mxu0 0
    %99 = vmatprep.subr.bf16.mxu0 0
    %100 = vmatpush1.bf16.msra.mxu0 0
    %101 = vmatprep.mubr.bf16.mxu0 0
    %102 = vmatmul.mubr.bf16.gmra.mrb[0].mxu0 %v67
    %v103 = vpop.f32.mrb[0].mxu0
    %v104 = vadd.f32 %v41, %v103
    %v105 = vpop.f32.mrb[0].mxu0
    %v106 = vpop.f32.mrb[0].mxu0
    %v107 = vadd.f32 %v46, %v106
    %v108 = vpop.f32.mrb[0].mxu0
    %109 = vdwg.mxu0
    %v110 = vand.u32 2147483647, %v104
    %vm111 = vcmp.le.f32.partialorder %v110, 0.7853982
    %vm112 = vcmp.lt.s32.totalorder %v104, 0
    %v113 = vand.u32 %v104, 2139095040
    %v114 = vshrl.u32 %v113, 23
    %v115 = vsub.s32 %v114, 127
    %v116 = vand.u32 2147483647, %v104
    %v117 = vand.u32 %v116, 8388607
    %v118 = vor.u32 %v117, 8388608
    %v119 = vsub.s32 0, %v118
    %v120 = vadd.s32 %v115, 1
    %vm121 = vcmp.gt.s32.totalorder %v120, 0
    %v122 = vsel %vm121, %v120, 0
    %v123 = vshrl.u32 %v122, 5
    %v124 = vand.u32 %v122, 31
    %v125 = vsub.s32 32, %v124
    %v126 = vshrl.u32 683565275, %v125
    %v127 = vshll.u32 683565275, %v124
    %v128 = vshrl.u32 2475754826, %v125
    %v129 = vor.u32 %v127, %v128
    %v130 = vshll.u32 2475754826, %v124
    %v131 = vshrl.u32 2131351028, %v125
    %v132 = vor.u32 %v130, %v131
    %v133 = vshll.u32 2131351028, %v124
    %v134 = vshrl.u32 2102212464, %v125
    %v135 = vor.u32 %v133, %v134
    %v136 = vshll.u32 2102212464, %v124
    %v137 = vshrl.u32 920167782, %v125
    %v138 = vor.u32 %v136, %v137
    %v139 = vshll.u32 920167782, %v124
    %v140 = vshrl.u32 1326507024, %v125
    %v141 = vor.u32 %v139, %v140
    %vm142 = vcmp.lt.s32.totalorder %v123, 1
    %vm143 = vcmp.lt.s32.totalorder %v123, 2
    %vm144 = vcmp.lt.s32.totalorder %v123, 3
    %vm145 = vcmp.lt.s32.totalorder %v123, 4
    %v146 = vsel %vm142, %v126, %v129
    %v147 = vsel %vm145, %v135, 2102212464
    %v148 = vsel %vm144, %v132, %v147
    %v149 = vsel %vm143, %v146, %v148
    %v150 = vsel %vm142, %v129, %v132
    %v151 = vsel %vm145, %v138, 920167782
    %v152 = vsel %vm144, %v135, %v151
    %v153 = vsel %vm143, %v150, %v152
    %v154 = vsel %vm142, %v132, %v135
    %v155 = vsel %vm145, %v141, 1326507024
    %v156 = vsel %vm144, %v138, %v155
    %v157 = vsel %vm143, %v154, %v156
    %v158 = vshll.u32 %v118, 8
    %v159 = vmul.u32.u64.compose %v158, %v157
    %v160 = vextract.low.u32 %v159
    %v161 = vextract.high.u32 %v159
    %v162 = vmul.u32.u64.compose %v158, %v153
    %v163 = vextract.low.u32 %v162
    %v164 = vextract.high.u32 %v162
    %v165 = vmul.u32 %v158, %v149
    %v166 = vadd.s32 %v161, %v163
    %vm167 = vc.u32 %v161, %v163
    %v168 = vadd.s32 %v164, 1
    %v169 = vsel %vm167, %v168, %v164
    %v170 = vadd.s32 %v165, %v169
    %v171 = vadd.s32 %v170, 536870912
    %v172 = vshrl.u32 %v171, 30
    %v173 = vshll.u32 %v172, 30
    %v174 = vsub.s32 %v170, %v173
    %vm175 = vcmp.lt.s32.totalorder %v174, 0
    %v176 = vsub.s32 0, %v174
    %v177 = vsel %vm175, %v176, %v174
    %v178 = vclz %v177
    %v179 = vsub.s32 %v178, 2
    %vm180 = vcmp.gt.s32.totalorder 0, %v179
    %v181 = vsel %vm180, 0, %v179
    %v182 = vsub.s32 32, %v181
    %v183 = vshll.u32 %v174, %v181
    %v184 = vshrl.u32 %v166, %v182
    %v185 = vor.u32 %v183, %v184
    %v186 = vsub.s32 4294967266, %v181
    %v187 = vadd.s32 %v186, 127
    %v188 = vshll.u32 %v187, 23
    %v189 = vor.u32 4788187, %v188
    %v190 = vand.u32 2147483647, %v189
    %v192 = vcvt.s32.f32 %v185
    %v193 = vmul.f32 %v192, %v190
    %v194 = vxor.u32 %v193, 2147483648
    %v195 = vsel %vm112, %v194, %v193
    %v196 = vsub.s32 4, %v172
    %v197 = vsel %vm112, %v196, %v172
    %v198 = vsel %vm111, %v104, %v195
    %v199 = vsel %vm111, 0, %v197
    %v200 = vcosq.f32.pop %v198
    %v201 = vsinq.f32.pop %v198
    %vm202 = vweird.f32 %v104
    %v203 = vadd.s32 %v199, 3
    %v204 = vand.u32 %v203, 3
    %vm205 = vcmp.lt.s32.totalorder %v204, 2
    %vm206 = vcmp.eq.s32.totalorder %v204, 0
    %v207 = vxor.u32 %v201, 2147483648
    %v208 = vsel %vm206, %v200, %v207
    %vm209 = vcmp.eq.s32.totalorder %v204, 2
    %v210 = vxor.u32 %v200, 2147483648
    %v211 = vsel %vm209, %v210, %v201
    %v212 = vsel %vm205, %v208, %v211
    %v213 = vsel %vm202, nan, %v212
    %v214 = vand.u32 2147483647, %v107
    %vm215 = vcmp.le.f32.partialorder %v214, 0.7853982
    %vm216 = vcmp.lt.s32.totalorder %v107, 0
    %v217 = vand.u32 %v107, 2139095040
    %v218 = vshrl.u32 %v217, 23
    %v219 = vsub.s32 %v218, 127
    %v220 = vand.u32 2147483647, %v107
    %v221 = vand.u32 %v220, 8388607
    %v222 = vor.u32 %v221, 8388608
    %v223 = vsub.s32 0, %v222
    %v224 = vadd.s32 %v219, 1
    %vm225 = vcmp.gt.s32.totalorder %v224, 0
    %v226 = vsel %vm225, %v224, 0
    %v227 = vshrl.u32 %v226, 5
    %v228 = vand.u32 %v226, 31
    %v229 = vsub.s32 32, %v228
    %v230 = vshrl.u32 683565275, %v229
    %v231 = vshll.u32 683565275, %v228
    %v232 = vshrl.u32 2475754826, %v229
    %v233 = vor.u32 %v231, %v232
    %v234 = vshll.u32 2475754826, %v228
    %v235 = vshrl.u32 2131351028, %v229
    %v236 = vor.u32 %v234, %v235
    %v237 = vshll.u32 2131351028, %v228
    %v238 = vshrl.u32 2102212464, %v229
    %v239 = vor.u32 %v237, %v238
    %v240 = vshll.u32 2102212464, %v228
    %v241 = vshrl.u32 920167782, %v229
    %v242 = vor.u32 %v240, %v241
    %v243 = vshll.u32 920167782, %v228
    %v244 = vshrl.u32 1326507024, %v229
    %v245 = vor.u32 %v243, %v244
    %vm246 = vcmp.lt.s32.totalorder %v227, 1
    %vm247 = vcmp.lt.s32.totalorder %v227, 2
    %vm248 = vcmp.lt.s32.totalorder %v227, 3
    %vm249 = vcmp.lt.s32.totalorder %v227, 4
    %v250 = vsel %vm246, %v230, %v233
    %v251 = vsel %vm249, %v239, 2102212464
    %v252 = vsel %vm248, %v236, %v251
    %v253 = vsel %vm247, %v250, %v252
    %v254 = vsel %vm246, %v233, %v236
    %v255 = vsel %vm249, %v242, 920167782
    %v256 = vsel %vm248, %v239, %v255
    %v257 = vsel %vm247, %v254, %v256
    %v258 = vsel %vm246, %v236, %v239
    %v259 = vsel %vm249, %v245, 1326507024
    %v260 = vsel %vm248, %v242, %v259
    %v261 = vsel %vm247, %v258, %v260
    %v262 = vshll.u32 %v222, 8
    %v263 = vmul.u32.u64.compose %v262, %v261
    %v264 = vextract.low.u32 %v263
    %v265 = vextract.high.u32 %v263
    %v266 = vmul.u32.u64.compose %v262, %v257
    %v267 = vextract.low.u32 %v266
    %v268 = vextract.high.u32 %v266
    %v269 = vmul.u32 %v262, %v253
    %v270 = vadd.s32 %v265, %v267
    %vm271 = vc.u32 %v265, %v267
    %v272 = vadd.s32 %v268, 1
    %v273 = vsel %vm271, %v272, %v268
    %v274 = vadd.s32 %v269, %v273
    %v275 = vadd.s32 %v274, 536870912
    %v276 = vshrl.u32 %v275, 30
    %v277 = vshll.u32 %v276, 30
    %v278 = vsub.s32 %v274, %v277
    %vm279 = vcmp.lt.s32.totalorder %v278, 0
    %v280 = vsub.s32 0, %v278
    %v281 = vsel %vm279, %v280, %v278
    %v282 = vclz %v281
    %v283 = vsub.s32 %v282, 2
    %vm284 = vcmp.gt.s32.totalorder 0, %v283
    %v285 = vsel %vm284, 0, %v283
    %v286 = vsub.s32 32, %v285
    %v287 = vshll.u32 %v278, %v285
    %v288 = vshrl.u32 %v270, %v286
    %v289 = vor.u32 %v287, %v288
    %v290 = vsub.s32 4294967266, %v285
    %v291 = vadd.s32 %v290, 127
    %v292 = vshll.u32 %v291, 23
    %v293 = vor.u32 4788187, %v292
    %v294 = vand.u32 2147483647, %v293
    %v296 = vcvt.s32.f32 %v289
    %v297 = vmul.f32 %v296, %v294
    %v298 = vxor.u32 %v297, 2147483648
    %v299 = vsel %vm216, %v298, %v297
    %v300 = vsub.s32 4, %v276
    %v301 = vsel %vm216, %v300, %v276
    %v302 = vsel %vm215, %v107, %v299
    %v303 = vsel %vm215, 0, %v301
    %v304 = vcosq.f32.pop %v302
    %v305 = vsinq.f32.pop %v302
    %vm306 = vweird.f32 %v107
    %v307 = vadd.s32 %v303, 3
    %v308 = vand.u32 %v307, 3
    %vm309 = vcmp.lt.s32.totalorder %v308, 2
    %vm310 = vcmp.eq.s32.totalorder %v308, 0
    %v311 = vxor.u32 %v305, 2147483648
    %v312 = vsel %vm310, %v304, %v311
    %vm313 = vcmp.eq.s32.totalorder %v308, 2
    %v314 = vxor.u32 %v304, 2147483648
    %v315 = vsel %vm313, %v314, %v305
    %v316 = vsel %vm309, %v312, %v315
    %v317 = vsel %vm306, nan, %v316
    %v318 = vld [vmem:[%s3] sm:$0xf]
    %v319 = vld [vmem:[%s3 + $0x4] sm:$0xf]
    %v320 = vld [vmem:[%s3 + $0x8] sm:$0xf]
    %v321 = vld [vmem:[%s3 + $0xc] sm:$0xf]
    %v322 = vld [vmem:[%s3 + $0x10] sm:$0xf]
    %v323 = vld [vmem:[%s3 + $0x14] sm:$0xf]
    %v324 = vld [vmem:[%s3 + $0x18] sm:$0xf]
    %v325 = vld [vmem:[%s3 + $0x1c] sm:$0xf]
    %v326 = vpack.c.bf16 %v317, %v213
    %v327 = vld [vmem:[%s4] sm:$0xff]
    %v328 = vld [vmem:[%s4 + $0x8] sm:$0xff]
    %v329 = vld [vmem:[%s4 + $0x10] sm:$0xff]
    %v330 = vld [vmem:[%s4 + $0x18] sm:$0xff]
    %v331 = vld [vmem:[%s4 + $0x20] sm:$0xff]
    %v332 = vld [vmem:[%s4 + $0x28] sm:$0xff]
    %v333 = vld [vmem:[%s4 + $0x30] sm:$0xff]
    %v334 = vld [vmem:[%s4 + $0x38] sm:$0xff]
    %336 = vset.pattern.permute.xlu0 0
    %337 = vperm.xlu0 %336, %v327
    %v338 = vpop.permute.xlu0 %337
    %341 = vset.pattern.permute.xlu0 0
    %342 = vperm.xlu0 %341, %v328
    %v343 = vpop.permute.xlu0 %342
    %346 = vset.pattern.permute.xlu0 0
    %347 = vperm.xlu0 %346, %v329
    %v348 = vpop.permute.xlu0 %347
    %351 = vset.pattern.permute.xlu0 0
    %352 = vperm.xlu0 %351, %v330
    %v353 = vpop.permute.xlu0 %352
    %356 = vset.pattern.permute.xlu0 0
    %357 = vperm.xlu0 %356, %v331
    %v358 = vpop.permute.xlu0 %357
    %361 = vset.pattern.permute.xlu0 0
    %362 = vperm.xlu0 %361, %v332
    %v363 = vpop.permute.xlu0 %362
    %366 = vset.pattern.permute.xlu0 0
    %367 = vperm.xlu0 %366, %v333
    %v368 = vpop.permute.xlu0 %367
    %371 = vset.pattern.permute.xlu0 0
    %372 = vperm.xlu0 %371, %v334
    %v373 = vpop.permute.xlu0 %372
    %v383 = vunpack.c.l.b16 %v318
    %v384 = vunpack.c.l.b16 %v319
    %v385 = vunpack.c.l.b16 %v320
    %v386 = vunpack.c.l.b16 %v321
    %v387 = vunpack.c.l.b16 %v322
    %v388 = vunpack.c.l.b16 %v323
    %v389 = vunpack.c.l.b16 %v324
    %v390 = vunpack.c.l.b16 %v325
    %v391 = vpack.c.b16 %v384, %v383
    %v392 = vpack.c.b16 %v386, %v385
    %v393 = vpack.c.b16 %v388, %v387
    %v394 = vpack.c.b16 %v390, %v389
    %vm395 = vcmask 130048
    %v397 = vsel %vm395, %v391, 0
    %v400 = vsel %vm395, %v392, 0
    %v403 = vsel %vm395, %v393, 0
    %v406 = vsel %vm395, %v394, 0
    %408 = vmatprep.subr.bf16.mxu0 0
    %409 = vmatpush1.bf16.msra.mxu0 %v326
    %410 = vmatprep.subr.bf16.mxu0 0
    %411 = vmatpush1.bf16.msra.mxu0 0
    %412 = vmatprep.subr.bf16.mxu0 0
    %413 = vmatpush1.bf16.msra.mxu0 0
    %414 = vmatprep.subr.bf16.mxu0 0
    %415 = vmatpush1.bf16.msra.mxu0 0
    %416 = vmatprep.subr.bf16.mxu0 0
    %417 = vmatpush1.bf16.msra.mxu0 0
    %418 = vmatprep.subr.bf16.mxu0 0
    %419 = vmatpush1.bf16.msra.mxu0 0
    %420 = vmatprep.subr.bf16.mxu0 0
    %421 = vmatpush1.bf16.msra.mxu0 0
    %422 = vmatprep.subr.bf16.mxu0 0
    %423 = vmatpush1.bf16.msra.mxu0 0
    %424 = vmatprep.subr.bf16.mxu0 0
    %425 = vmatpush1.bf16.msra.mxu0 0
    %426 = vmatprep.subr.bf16.mxu0 0
    %427 = vmatpush1.bf16.msra.mxu0 0
    %428 = vmatprep.subr.bf16.mxu0 0
    %429 = vmatpush1.bf16.msra.mxu0 0
    %430 = vmatprep.subr.bf16.mxu0 0
    %431 = vmatpush1.bf16.msra.mxu0 0
    %432 = vmatprep.subr.bf16.mxu0 0
    %433 = vmatpush1.bf16.msra.mxu0 0
    %434 = vmatprep.subr.bf16.mxu0 0
    %435 = vmatpush1.bf16.msra.mxu0 0
    %436 = vmatprep.subr.bf16.mxu0 0
    %437 = vmatpush1.bf16.msra.mxu0 0
    %438 = vmatprep.subr.bf16.mxu0 0
    %439 = vmatpush1.bf16.msra.mxu0 0
    %440 = vmatprep.mubr.bf16.mxu0 0
    %441 = vmatmul.mubr.bf16.gmra.mrb[0].mxu0 %v397
    %v442 = vpop.f32.mrb[0].mxu0
    %v443 = vadd.f32 %v338, %v442
    %v444 = vpop.f32.mrb[0].mxu0
    %v445 = vpop.f32.mrb[0].mxu0
    %v446 = vadd.f32 %v343, %v445
    %v447 = vpop.f32.mrb[0].mxu0
    %448 = vmatprep.mubr.bf16.mxu0 0
    %449 = vmatmul.mubr.bf16.gmra.mrb[0].mxu0 %v400
    %v450 = vpop.f32.mrb[0].mxu0
    %v451 = vadd.f32 %v348, %v450
    %v452 = vpop.f32.mrb[0].mxu0
    %v453 = vpop.f32.mrb[0].mxu0
    %v454 = vadd.f32 %v353, %v453
    %v455 = vpop.f32.mrb[0].mxu0
    %456 = vmatprep.mubr.bf16.mxu0 0
    %457 = vmatmul.mubr.bf16.gmra.mrb[0].mxu0 %v403
    %v458 = vpop.f32.mrb[0].mxu0
    %v459 = vadd.f32 %v358, %v458
    %v460 = vpop.f32.mrb[0].mxu0
    %v461 = vpop.f32.mrb[0].mxu0
    %v462 = vadd.f32 %v363, %v461
    %v463 = vpop.f32.mrb[0].mxu0
    %464 = vmatprep.mubr.bf16.mxu0 0
    %465 = vmatmul.mubr.bf16.gmra.mrb[0].mxu0 %v406
    %v466 = vpop.f32.mrb[0].mxu0
    %v467 = vadd.f32 %v368, %v466
    %v468 = vpop.f32.mrb[0].mxu0
    %v469 = vpop.f32.mrb[0].mxu0
    %v470 = vadd.f32 %v373, %v469
    %v471 = vpop.f32.mrb[0].mxu0
    %472 = vdwg.mxu0
    %v473 = vmax.f32 %v443, 0.0
    %v474 = vmax.f32 %v446, 0.0
    %v475 = vmax.f32 %v451, 0.0
    %v476 = vmax.f32 %v454, 0.0
    %v477 = vmax.f32 %v459, 0.0
    %v478 = vmax.f32 %v462, 0.0
    %v479 = vmax.f32 %v467, 0.0
    %v480 = vmax.f32 %v470, 0.0
    %v481 = vld [vmem:[%s5] sm:$0xff]
    %v482 = vld [vmem:[%s5 + $0x8] sm:$0xff]
    %v483 = vld [vmem:[%s5 + $0x10] sm:$0xff]
    %v484 = vld [vmem:[%s5 + $0x18] sm:$0xff]
    %v485 = vld [vmem:[%s5 + $0x20] sm:$0xff]
    %v486 = vld [vmem:[%s5 + $0x28] sm:$0xff]
    %v487 = vld [vmem:[%s5 + $0x30] sm:$0xff]
    %v488 = vld [vmem:[%s5 + $0x38] sm:$0xff]
    %490 = vset.pattern.permute.xlu0 0
    %491 = vperm.xlu0 %490, %v481
    %v492 = vpop.permute.xlu0 %491
    %495 = vset.pattern.permute.xlu0 0
    %496 = vperm.xlu0 %495, %v482
    %v497 = vpop.permute.xlu0 %496
    %500 = vset.pattern.permute.xlu0 0
    %501 = vperm.xlu0 %500, %v483
    %v502 = vpop.permute.xlu0 %501
    %505 = vset.pattern.permute.xlu0 0
    %506 = vperm.xlu0 %505, %v484
    %v507 = vpop.permute.xlu0 %506
    %510 = vset.pattern.permute.xlu0 0
    %511 = vperm.xlu0 %510, %v485
    %v512 = vpop.permute.xlu0 %511
    %515 = vset.pattern.permute.xlu0 0
    %516 = vperm.xlu0 %515, %v486
    %v517 = vpop.permute.xlu0 %516
    %520 = vset.pattern.permute.xlu0 0
    %521 = vperm.xlu0 %520, %v487
    %v522 = vpop.permute.xlu0 %521
    %525 = vset.pattern.permute.xlu0 0
    %526 = vperm.xlu0 %525, %v488
    %v527 = vpop.permute.xlu0 %526
    %v529 = vmul.f32 %v473, %v492
    %v530 = vmul.f32 %v474, %v497
    %v531 = vmul.f32 %v475, %v502
    %v532 = vmul.f32 %v476, %v507
    %v533 = vmul.f32 %v477, %v512
    %v534 = vmul.f32 %v478, %v517
    %v535 = vmul.f32 %v479, %v522
    %v536 = vmul.f32 %v480, %v527
    %v537 = vadd.f32 %v529, %v530
    %v538 = vadd.f32 %v537, %v531
    %v539 = vadd.f32 %v538, %v532
    %v540 = vadd.f32 %v539, %v533
    %v541 = vadd.f32 %v540, %v534
    %v542 = vadd.f32 %v541, %v535
    %v543 = vadd.f32 %v542, %v536
    %v544 = vrot.slane %v543, 4
    %v545 = vadd.f32 %v543, %v544
    %v546 = vrot.slane %v545, 2
    %v547 = vadd.f32 %v545, %v546
    %v548 = vrot.slane %v547, 1
    %v549 = vadd.f32 %v547, %v548
    %v550 = vld [vmem:[#allocation2] sm:$0x1]
    %552 = vset.pattern.permute.xlu0 0
    %553 = vperm.xlu0 %552, %v550
    %v554 = vpop.permute.xlu0 %553
    %v556 = vlaneseq
    %v557 = vshrl.u32 %v556, 7
    %v558 = vsub.s32 0, %v557
    %v559 = vrot.slane %v554, %v558
    %v560 = vadd.f32 %v549, %v559
    %561 = vst [vmem:[#allocation3] sm:$0x1] %v560
    // Predicated region
    $region30: #{tpu_custom_call.1} parent=1 // pred_check
      _
    $region31: #{tpu_custom_call.1} parent=1 // pred_check_branch
      %563 = sbr.rel (0) target = $region33
    $region32: #{tpu_custom_call.1} parent=1 // pred_region
      %s565 = ssub.s32 16, 16
      %566 = vsyncadd [#allocation4], %s565
      %s568 = sshll.u32 [#allocation3], 4
      %s569 = int_to_ptr.vmem [resolvable:$true] %s568
      %571 = dma.vmem_to_hbm [thread:$0]  %s569, 16, %s7, [#allocation4]
    $region33: #{tpu_custom_call.1} parent=1 // pred_fallthru
      _
    // Predicated region
    $region34: #{tpu_custom_call.1} parent=1 // pred_check
      _
    $region35: #{tpu_custom_call.1} parent=1 // pred_check_branch
      %573 = sbr.rel (0) target = $region37
    $region36: #{tpu_custom_call.1} parent=1 // pred_region
      %574 = dma.done [#allocation4], 16
    $region37: #{tpu_custom_call.1} parent=1 // pred_fallthru
      _
    %575 = vsyncpa [#allocation4], 1

</llo_original>
